<compile_context>
chip_gen: v7x
topology: tpu7x:2x2x1
jax: 0.10.0
libtpu: 0.0.40
codegen_flags: <defaults>
</compile_context>

<pallas_src>
import functools

import jax
import jax.numpy as jnp
from jax import lax
from jax.experimental import pallas as pl
from jax.experimental.pallas import tpu as pltpu


def _round_up(a, b):
    return ((a + b - 1) // b) * b


# ----------------------------------------------------------------------------
# Fused kernel: all BitLinear layers for one batch tile.
# ----------------------------------------------------------------------------
def _fcmnist_kernel(mags_ref, x_ref, *rest, num_layers):
    """rest = (w_sign_ref_0, ..., w_sign_ref_{L-1}, o_ref).

    mags_ref : SMEM f32[L]      per-tensor weight magnitudes
    x_ref    : VMEM f32[TB, D0] batch tile of flattened images
    w refs   : VMEM bf16[D_l, K_l] binarized (±1/0) transposed weights
    o_ref    : VMEM f32[TB, C_pad] lane-dense padded logits
    """
    w_refs = rest[:num_layers]
    o_ref = rest[num_layers]

    h = x_ref[...].astype(jnp.float32)  # [TB, D0]
    for l in range(num_layers):
        relu = l < num_layers - 1
        mag = mags_ref[l]                                   # scalar (SMEM)
        w_sign = w_refs[l][...]                             # [D, K] bf16

        d = h.shape[-1]
        # RMS normalization (EUP rsqrt; 1/d is a power of two -> exact).
        ssq = jnp.sum(h * h, axis=-1, keepdims=True)
        h_norm = h * lax.rsqrt(ssq * (1.0 / d))

        # 8-bit activation quantization (keep the integer grid, defer 1/a_scale).
        amax = jnp.maximum(jnp.max(jnp.abs(h_norm), axis=-1, keepdims=True), 1e-5)
        a_scale = 127.0 / amax
        h_int = jnp.clip(jnp.round(h_norm * a_scale), -128.0, 127.0)

        # bf16 integer-like operands -> MXU, exact f32 accumulation (D <= 256).
        y = jnp.dot(h_int.astype(jnp.bfloat16), w_sign,
                    preferred_element_type=jnp.float32)     # [TB, K]

        # Apply both scales post-matmul in f32:  y * mag / a_scale.
        y = y * (mag * amax * (1.0 / 127.0))

        if relu:
            y = jnp.maximum(y, 0.0)
        h = y

    o_ref[...] = h.astype(o_ref.dtype)


# ----------------------------------------------------------------------------
# JAX wrapper
# ----------------------------------------------------------------------------
def _binarize(w):
    """Binary / PerTensor weight quantization, hoisted out of the kernel.

    w: [out, in] f32 (PyTorch nn.Linear layout).
    Returns (w_sign_T, mag): w_sign_T is [in, out] bf16 with values in {-1,0,1},
    mag is the per-tensor f32 scale.
    """
    e = jnp.mean(w)
    mag = jnp.maximum(jnp.mean(jnp.abs(w)), 1e-5)
    w_sign_t = jnp.sign(w - e).T.astype(jnp.bfloat16)
    return w_sign_t, mag.astype(jnp.float32)


def fcmnist_forward(params, x_nchw, width3=64):
    """FCMNIST forward. x_nchw: [N, 1, 16, 16] float32 -> logits [N, 10]."""
    n = x_nchw.shape[0]
    x = x_nchw.reshape(n, -1).astype(jnp.float32)           # == x.view(N, -1)
    d_in = x.shape[1]

    layer_names = ["fc1", "fc2"] + (["fc3"] if width3 > 0 else []) + ["fcl"]
    num_layers = len(layer_names)

    w_signs, mags = [], []
    for name in layer_names:
        ws, m = _binarize(params[name])
        w_signs.append(ws)
        mags.append(m)
    mags_arr = jnp.stack(mags)                               # [L] f32 (SMEM)

    # Pad the class dimension of the last layer to 128 lanes -> unmasked stores.
    num_classes = params["fcl"].shape[0]
    c_pad = _round_up(max(num_classes, 128), 128)
    w_last = w_signs[-1]
    w_signs[-1] = jnp.pad(w_last, ((0, 0), (0, c_pad - w_last.shape[1])))

    # Batch tiling: TB rows per grid step (bounded VMEM, auto double-buffered x).
    tb = min(256, _round_up(max(n, 1), 8))
    n_pad = _round_up(n, tb)
    if n_pad != n:
        # Padded rows are discarded below (they are row-independent).
        x = jnp.pad(x, ((0, n_pad - n), (0, 0)))
    grid = (n_pad // tb,)

    in_specs = [
        pl.BlockSpec(memory_space=pltpu.MemorySpace.SMEM),   # mags
        pl.BlockSpec((tb, d_in), lambda i: (i, 0)),          # x batch tile
    ]
    for ws in w_signs:                                       # weights: resident
        in_specs.append(pl.BlockSpec(ws.shape, lambda i: (0, 0)))

    kernel = functools.partial(_fcmnist_kernel, num_layers=num_layers)
    out_padded = pl.pallas_call(
        kernel,
        out_shape=jax.ShapeDtypeStruct((n_pad, c_pad), jnp.float32),
        grid=grid,
        in_specs=in_specs,
        out_specs=pl.BlockSpec((tb, c_pad), lambda i: (i, 0)),
        compiler_params=pltpu.CompilerParams(
            dimension_semantics=("parallel",),               # v7x: 2 TCs split batch
        ),
    )(mags_arr, x, *w_signs)

    return out_padded[:n, :num_classes]


# ----------------------------------------------------------------------------
# Parameter init (nn.Linear-style uniform, PyTorch [out, in] layout)
# ----------------------------------------------------------------------------
def init_fcmnist_params(key, width1=64, width2=64, width3=64, num_classes=10,
                        in_features=256):
    def linear_w(k, out_f, in_f):
        bound = 1.0 / jnp.sqrt(jnp.float32(in_f))
        return jax.random.uniform(k, (out_f, in_f), jnp.float32, -bound, bound)

    k1, k2, k3, k4 = jax.random.split(key, 4)
    params = {
        "fc1": linear_w(k1, width1, in_features),
        "fc2": linear_w(k2, width2, width1),
    }
    if width3 > 0:
        params["fc3"] = linear_w(k3, width3, width2)
        params["fcl"] = linear_w(k4, num_classes, width3)
    else:
        params["fcl"] = linear_w(k4, num_classes, width2)
    return params


# ----------------------------------------------------------------------------
# Pure-JAX reference (faithful to the PyTorch forward) for validation
# ----------------------------------------------------------------------------
def fcmnist_reference(params, x_nchw, width3=64):
    n = x_nchw.shape[0]
    x = x_nchw.reshape(n, -1).astype(jnp.float32)

    def bitlinear_ref(x, w, relu):
        rms = jnp.sqrt(jnp.mean(x * x, axis=-1, keepdims=True))
        xn = x / rms
        amax = jnp.maximum(jnp.max(jnp.abs(xn), axis=-1, keepdims=True), 1e-5)
        s = 127.0 / amax
        xq = jnp.clip(jnp.round(xn * s), -128.0, 127.0) / s
        mag = jnp.maximum(jnp.mean(jnp.abs(w)), 1e-5)
        e = jnp.mean(w)
        wq = jnp.sign(w - e) * mag
        y = xq @ wq.T
        return jnp.maximum(y, 0.0) if relu else y

    x = bitlinear_ref(x, params["fc1"], True)
    x = bitlinear_ref(x, params["fc2"], True)
    if width3 > 0:
        x = bitlinear_ref(x, params["fc3"], True)
    return bitlinear_ref(x, params["fcl"], False)


if __name__ == "__main__":
    key = jax.random.PRNGKey(0)
    k_params, k_input = jax.random.split(key)

    # Small deterministic example input: batch=2, NCHW [2, 1, 16, 16]
    x = jax.random.normal(k_input, (2, 1, 16, 16), dtype=jnp.float32)
    params = init_fcmnist_params(k_params, width1=64, width2=64, width3=64)

    logits = jax.jit(fcmnist_forward)(params, x)
    jax.block_until_ready(logits)

    assert logits.shape == (2, 10)
    assert logits.dtype == jnp.float32

    # Sanity-check against the straightforward (PyTorch-order) reference math.
    ref = fcmnist_reference(params, x, width3=64)
    jax.block_until_ready(ref)
    assert bool(jnp.all(jnp.isfinite(logits)))
    assert bool(jnp.allclose(logits, ref, rtol=1e-2, atol=1e-2)), (
        "max abs err = %f" % float(jnp.max(jnp.abs(logits - ref))))

    print("KERNEL_OK")
</pallas_src>

<mosaic_0001>
module attributes {stable_mosaic.version = 11 : i64} {
  func.func @_fcmnist_kernel(%arg0: i32, %arg1: memref<4xf32, #tpu.memory_space<smem>>, %arg2: memref<8x256xf32, #tpu.memory_space<vmem>>, %arg3: memref<256x64xbf16, #tpu.memory_space<vmem>>, %arg4: memref<64x64xbf16, #tpu.memory_space<vmem>>, %arg5: memref<64x64xbf16, #tpu.memory_space<vmem>>, %arg6: memref<64x128xbf16, #tpu.memory_space<vmem>>, %arg7: memref<8x128xf32, #tpu.memory_space<vmem>>) attributes {dimension_semantics = [#tpu.dimension_semantics<parallel>], iteration_bounds = array<i64: 1>, scalar_prefetch = 0 : i64, scratch_operands = 0 : i64, tpu.core_type = #tpu.core_type<tc>, window_params = [{transform_indices = @transform_0, window_bounds = array<i64: 4>}, {transform_indices = @transform_1, window_bounds = array<i64: 8, 256>}, {pipeline_mode = #tpu.pipeline_mode<synchronous>, transform_indices = @transform_2, window_bounds = array<i64: 256, 64>}, {pipeline_mode = #tpu.pipeline_mode<synchronous>, transform_indices = @transform_3, window_bounds = array<i64: 64, 64>}, {pipeline_mode = #tpu.pipeline_mode<synchronous>, transform_indices = @transform_4, window_bounds = array<i64: 64, 64>}, {pipeline_mode = #tpu.pipeline_mode<synchronous>, transform_indices = @transform_5, window_bounds = array<i64: 64, 128>}, {transform_indices = @transform_6, window_bounds = array<i64: 8, 128>}]} {
    %c0 = arith.constant 0 : index
    %c0_0 = arith.constant 0 : index
    %0 = vector.load %arg2[%c0, %c0_0] : memref<8x256xf32, #tpu.memory_space<vmem>>, vector<8x256xf32>
    %c0_1 = arith.constant 0 : index
    %1 = memref.load %arg1[%c0_1] : memref<4xf32, #tpu.memory_space<smem>>
    %c0_2 = arith.constant 0 : index
    %c0_3 = arith.constant 0 : index
    %2 = vector.load %arg3[%c0_2, %c0_3] : memref<256x64xbf16, #tpu.memory_space<vmem>>, vector<256x64xbf16>
    %3 = arith.mulf %0, %0 : vector<8x256xf32>
    %cst = arith.constant dense<0.000000e+00> : vector<8xf32>
    %4 = vector.multi_reduction <add>, %3, %cst [1] : vector<8x256xf32> to vector<8xf32>
    %5 = vector.shape_cast %4 : vector<8xf32> to vector<8x1xf32>
    %cst_4 = arith.constant 3.906250e-03 : f32
    %6 = vector.broadcast %cst_4 : f32 to vector<8x1xf32>
    %7 = arith.mulf %5, %6 : vector<8x1xf32>
    %8 = math.rsqrt %7 : vector<8x1xf32>
    %9 = vector.broadcast %8 : vector<8x1xf32> to vector<8x256xf32>
    %10 = arith.mulf %0, %9 : vector<8x256xf32>
    %11 = math.absf %10 : vector<8x256xf32>
    %cst_5 = arith.constant dense<0xFF800000> : vector<8xf32>
    %12 = vector.multi_reduction <maximumf>, %11, %cst_5 [1] : vector<8x256xf32> to vector<8xf32>
    %13 = vector.shape_cast %12 : vector<8xf32> to vector<8x1xf32>
    %cst_6 = arith.constant 9.99999974E-6 : f32
    %14 = vector.broadcast %cst_6 : f32 to vector<8x1xf32>
    %15 = arith.maximumf %13, %14 : vector<8x1xf32>
    %cst_7 = arith.constant 1.270000e+02 : f32
    %16 = vector.broadcast %cst_7 : f32 to vector<8x1xf32>
    %17 = arith.divf %16, %15 : vector<8x1xf32>
    %18 = vector.broadcast %17 : vector<8x1xf32> to vector<8x256xf32>
    %19 = arith.mulf %10, %18 : vector<8x256xf32>
    %20 = math.roundeven %19 : vector<8x256xf32>
    %cst_8 = arith.constant -1.280000e+02 : f32
    %cst_9 = arith.constant 1.270000e+02 : f32
    %21 = vector.broadcast %cst_8 : f32 to vector<8x256xf32>
    %22 = arith.maximumf %21, %20 : vector<8x256xf32>
    %23 = vector.broadcast %cst_9 : f32 to vector<8x256xf32>
    %24 = arith.minimumf %23, %22 : vector<8x256xf32>
    %25 = arith.truncf %24 : vector<8x256xf32> to vector<8x256xbf16>
    %cst_10 = arith.constant dense<0.000000e+00> : vector<8x64xf32>
    %26 = tpu.matmul %25, %2, %cst_10 {dimension_numbers = #tpu.dot_dimension_numbers<[1], [0], [0], [1], [0, 0, 1, 1], [], []>} : vector<8x256xbf16>, vector<256x64xbf16>, vector<8x64xf32> -> vector<8x64xf32>
    %27 = vector.broadcast %1 : f32 to vector<8x1xf32>
    %28 = arith.mulf %27, %15 : vector<8x1xf32>
    %cst_11 = arith.constant 0.00787401571 : f32
    %29 = vector.broadcast %cst_11 : f32 to vector<8x1xf32>
    %30 = arith.mulf %28, %29 : vector<8x1xf32>
    %31 = vector.broadcast %30 : vector<8x1xf32> to vector<8x64xf32>
    %32 = arith.mulf %26, %31 : vector<8x64xf32>
    %cst_12 = arith.constant 0.000000e+00 : f32
    %33 = vector.broadcast %cst_12 : f32 to vector<8x64xf32>
    %34 = arith.maximumf %32, %33 : vector<8x64xf32>
    %c1 = arith.constant 1 : index
    %35 = memref.load %arg1[%c1] : memref<4xf32, #tpu.memory_space<smem>>
    %c0_13 = arith.constant 0 : index
    %c0_14 = arith.constant 0 : index
    %36 = vector.load %arg4[%c0_13, %c0_14] : memref<64x64xbf16, #tpu.memory_space<vmem>>, vector<64x64xbf16>
    %37 = arith.mulf %34, %34 : vector<8x64xf32>
    %cst_15 = arith.constant dense<0.000000e+00> : vector<8xf32>
    %38 = vector.multi_reduction <add>, %37, %cst_15 [1] : vector<8x64xf32> to vector<8xf32>
    %39 = vector.shape_cast %38 : vector<8xf32> to vector<8x1xf32>
    %cst_16 = arith.constant 1.562500e-02 : f32
    %40 = vector.broadcast %cst_16 : f32 to vector<8x1xf32>
    %41 = arith.mulf %39, %40 : vector<8x1xf32>
    %42 = math.rsqrt %41 : vector<8x1xf32>
    %43 = vector.broadcast %42 : vector<8x1xf32> to vector<8x64xf32>
    %44 = arith.mulf %34, %43 : vector<8x64xf32>
    %45 = math.absf %44 : vector<8x64xf32>
    %cst_17 = arith.constant dense<0xFF800000> : vector<8xf32>
    %46 = vector.multi_reduction <maximumf>, %45, %cst_17 [1] : vector<8x64xf32> to vector<8xf32>
    %47 = vector.shape_cast %46 : vector<8xf32> to vector<8x1xf32>
    %cst_18 = arith.constant 9.99999974E-6 : f32
    %48 = vector.broadcast %cst_18 : f32 to vector<8x1xf32>
    %49 = arith.maximumf %47, %48 : vector<8x1xf32>
    %cst_19 = arith.constant 1.270000e+02 : f32
    %50 = vector.broadcast %cst_19 : f32 to vector<8x1xf32>
    %51 = arith.divf %50, %49 : vector<8x1xf32>
    %52 = vector.broadcast %51 : vector<8x1xf32> to vector<8x64xf32>
    %53 = arith.mulf %44, %52 : vector<8x64xf32>
    %54 = math.roundeven %53 : vector<8x64xf32>
    %cst_20 = arith.constant -1.280000e+02 : f32
    %cst_21 = arith.constant 1.270000e+02 : f32
    %55 = vector.broadcast %cst_20 : f32 to vector<8x64xf32>
    %56 = arith.maximumf %55, %54 : vector<8x64xf32>
    %57 = vector.broadcast %cst_21 : f32 to vector<8x64xf32>
    %58 = arith.minimumf %57, %56 : vector<8x64xf32>
    %59 = arith.truncf %58 : vector<8x64xf32> to vector<8x64xbf16>
    %cst_22 = arith.constant dense<0.000000e+00> : vector<8x64xf32>
    %60 = tpu.matmul %59, %36, %cst_22 {dimension_numbers = #tpu.dot_dimension_numbers<[1], [0], [0], [1], [0, 0, 1, 1], [], []>} : vector<8x64xbf16>, vector<64x64xbf16>, vector<8x64xf32> -> vector<8x64xf32>
    %61 = vector.broadcast %35 : f32 to vector<8x1xf32>
    %62 = arith.mulf %61, %49 : vector<8x1xf32>
    %cst_23 = arith.constant 0.00787401571 : f32
    %63 = vector.broadcast %cst_23 : f32 to vector<8x1xf32>
    %64 = arith.mulf %62, %63 : vector<8x1xf32>
    %65 = vector.broadcast %64 : vector<8x1xf32> to vector<8x64xf32>
    %66 = arith.mulf %60, %65 : vector<8x64xf32>
    %cst_24 = arith.constant 0.000000e+00 : f32
    %67 = vector.broadcast %cst_24 : f32 to vector<8x64xf32>
    %68 = arith.maximumf %66, %67 : vector<8x64xf32>
    %c2 = arith.constant 2 : index
    %69 = memref.load %arg1[%c2] : memref<4xf32, #tpu.memory_space<smem>>
    %c0_25 = arith.constant 0 : index
    %c0_26 = arith.constant 0 : index
    %70 = vector.load %arg5[%c0_25, %c0_26] : memref<64x64xbf16, #tpu.memory_space<vmem>>, vector<64x64xbf16>
    %71 = arith.mulf %68, %68 : vector<8x64xf32>
    %cst_27 = arith.constant dense<0.000000e+00> : vector<8xf32>
    %72 = vector.multi_reduction <add>, %71, %cst_27 [1] : vector<8x64xf32> to vector<8xf32>
    %73 = vector.shape_cast %72 : vector<8xf32> to vector<8x1xf32>
    %cst_28 = arith.constant 1.562500e-02 : f32
    %74 = vector.broadcast %cst_28 : f32 to vector<8x1xf32>
    %75 = arith.mulf %73, %74 : vector<8x1xf32>
    %76 = math.rsqrt %75 : vector<8x1xf32>
    %77 = vector.broadcast %76 : vector<8x1xf32> to vector<8x64xf32>
    %78 = arith.mulf %68, %77 : vector<8x64xf32>
    %79 = math.absf %78 : vector<8x64xf32>
    %cst_29 = arith.constant dense<0xFF800000> : vector<8xf32>
    %80 = vector.multi_reduction <maximumf>, %79, %cst_29 [1] : vector<8x64xf32> to vector<8xf32>
    %81 = vector.shape_cast %80 : vector<8xf32> to vector<8x1xf32>
    %cst_30 = arith.constant 9.99999974E-6 : f32
    %82 = vector.broadcast %cst_30 : f32 to vector<8x1xf32>
    %83 = arith.maximumf %81, %82 : vector<8x1xf32>
    %cst_31 = arith.constant 1.270000e+02 : f32
    %84 = vector.broadcast %cst_31 : f32 to vector<8x1xf32>
    %85 = arith.divf %84, %83 : vector<8x1xf32>
    %86 = vector.broadcast %85 : vector<8x1xf32> to vector<8x64xf32>
    %87 = arith.mulf %78, %86 : vector<8x64xf32>
    %88 = math.roundeven %87 : vector<8x64xf32>
    %cst_32 = arith.constant -1.280000e+02 : f32
    %cst_33 = arith.constant 1.270000e+02 : f32
    %89 = vector.broadcast %cst_32 : f32 to vector<8x64xf32>
    %90 = arith.maximumf %89, %88 : vector<8x64xf32>
    %91 = vector.broadcast %cst_33 : f32 to vector<8x64xf32>
    %92 = arith.minimumf %91, %90 : vector<8x64xf32>
    %93 = arith.truncf %92 : vector<8x64xf32> to vector<8x64xbf16>
    %cst_34 = arith.constant dense<0.000000e+00> : vector<8x64xf32>
    %94 = tpu.matmul %93, %70, %cst_34 {dimension_numbers = #tpu.dot_dimension_numbers<[1], [0], [0], [1], [0, 0, 1, 1], [], []>} : vector<8x64xbf16>, vector<64x64xbf16>, vector<8x64xf32> -> vector<8x64xf32>
    %95 = vector.broadcast %69 : f32 to vector<8x1xf32>
    %96 = arith.mulf %95, %83 : vector<8x1xf32>
    %cst_35 = arith.constant 0.00787401571 : f32
    %97 = vector.broadcast %cst_35 : f32 to vector<8x1xf32>
    %98 = arith.mulf %96, %97 : vector<8x1xf32>
    %99 = vector.broadcast %98 : vector<8x1xf32> to vector<8x64xf32>
    %100 = arith.mulf %94, %99 : vector<8x64xf32>
    %cst_36 = arith.constant 0.000000e+00 : f32
    %101 = vector.broadcast %cst_36 : f32 to vector<8x64xf32>
    %102 = arith.maximumf %100, %101 : vector<8x64xf32>
    %c3 = arith.constant 3 : index
    %103 = memref.load %arg1[%c3] : memref<4xf32, #tpu.memory_space<smem>>
    %c0_37 = arith.constant 0 : index
    %c0_38 = arith.constant 0 : index
    %104 = vector.load %arg6[%c0_37, %c0_38] : memref<64x128xbf16, #tpu.memory_space<vmem>>, vector<64x128xbf16>
    %105 = arith.mulf %102, %102 : vector<8x64xf32>
    %cst_39 = arith.constant dense<0.000000e+00> : vector<8xf32>
    %106 = vector.multi_reduction <add>, %105, %cst_39 [1] : vector<8x64xf32> to vector<8xf32>
    %107 = vector.shape_cast %106 : vector<8xf32> to vector<8x1xf32>
    %cst_40 = arith.constant 1.562500e-02 : f32
    %108 = vector.broadcast %cst_40 : f32 to vector<8x1xf32>
    %109 = arith.mulf %107, %108 : vector<8x1xf32>
    %110 = math.rsqrt %109 : vector<8x1xf32>
    %111 = vector.broadcast %110 : vector<8x1xf32> to vector<8x64xf32>
    %112 = arith.mulf %102, %111 : vector<8x64xf32>
    %113 = math.absf %112 : vector<8x64xf32>
    %cst_41 = arith.constant dense<0xFF800000> : vector<8xf32>
    %114 = vector.multi_reduction <maximumf>, %113, %cst_41 [1] : vector<8x64xf32> to vector<8xf32>
    %115 = vector.shape_cast %114 : vector<8xf32> to vector<8x1xf32>
    %cst_42 = arith.constant 9.99999974E-6 : f32
    %116 = vector.broadcast %cst_42 : f32 to vector<8x1xf32>
    %117 = arith.maximumf %115, %116 : vector<8x1xf32>
    %cst_43 = arith.constant 1.270000e+02 : f32
    %118 = vector.broadcast %cst_43 : f32 to vector<8x1xf32>
    %119 = arith.divf %118, %117 : vector<8x1xf32>
    %120 = vector.broadcast %119 : vector<8x1xf32> to vector<8x64xf32>
    %121 = arith.mulf %112, %120 : vector<8x64xf32>
    %122 = math.roundeven %121 : vector<8x64xf32>
    %cst_44 = arith.constant -1.280000e+02 : f32
    %cst_45 = arith.constant 1.270000e+02 : f32
    %123 = vector.broadcast %cst_44 : f32 to vector<8x64xf32>
    %124 = arith.maximumf %123, %122 : vector<8x64xf32>
    %125 = vector.broadcast %cst_45 : f32 to vector<8x64xf32>
    %126 = arith.minimumf %125, %124 : vector<8x64xf32>
    %127 = arith.truncf %126 : vector<8x64xf32> to vector<8x64xbf16>
    %cst_46 = arith.constant dense<0.000000e+00> : vector<8x128xf32>
    %128 = tpu.matmul %127, %104, %cst_46 {dimension_numbers = #tpu.dot_dimension_numbers<[1], [0], [0], [1], [0, 0, 1, 1], [], []>} : vector<8x64xbf16>, vector<64x128xbf16>, vector<8x128xf32> -> vector<8x128xf32>
    %129 = vector.broadcast %103 : f32 to vector<8x1xf32>
    %130 = arith.mulf %129, %117 : vector<8x1xf32>
    %cst_47 = arith.constant 0.00787401571 : f32
    %131 = vector.broadcast %cst_47 : f32 to vector<8x1xf32>
    %132 = arith.mulf %130, %131 : vector<8x1xf32>
    %133 = vector.broadcast %132 : vector<8x1xf32> to vector<8x128xf32>
    %134 = arith.mulf %128, %133 : vector<8x128xf32>
    %c0_48 = arith.constant 0 : index
    %c0_49 = arith.constant 0 : index
    %135 = vector.load %arg7[%c0_48, %c0_49] : memref<8x128xf32, #tpu.memory_space<vmem>>, vector<8x128xf32>
    tpu.vector_store %arg7[%c0_48, %c0_49], %134 {strides = array<i32>} : memref<8x128xf32, #tpu.memory_space<vmem>>, vector<8x128xf32>,
    return
  }
  func.func @transform_0(%arg0: i32) -> i32 {
    %c0_i32 = arith.constant 0 : i32
    %c0_i32_0 = arith.constant 0 : i32
    return %c0_i32 : i32
  }
  func.func @transform_1(%arg0: i32) -> (i32, i32) {
    %c0_i32 = arith.constant 0 : i32
    %c0_i32_0 = arith.constant 0 : i32
    return %arg0, %c0_i32 : i32, i32
  }
  func.func @transform_2(%arg0: i32) -> (i32, i32) {
    %c0_i32 = arith.constant 0 : i32
    %c0_i32_0 = arith.constant 0 : i32
    %c0_i32_1 = arith.constant 0 : i32
    return %c0_i32, %c0_i32_0 : i32, i32
  }
  func.func @transform_3(%arg0: i32) -> (i32, i32) {
    %c0_i32 = arith.constant 0 : i32
    %c0_i32_0 = arith.constant 0 : i32
    %c0_i32_1 = arith.constant 0 : i32
    return %c0_i32, %c0_i32_0 : i32, i32
  }
  func.func @transform_4(%arg0: i32) -> (i32, i32) {
    %c0_i32 = arith.constant 0 : i32
    %c0_i32_0 = arith.constant 0 : i32
    %c0_i32_1 = arith.constant 0 : i32
    return %c0_i32, %c0_i32_0 : i32, i32
  }
  func.func @transform_5(%arg0: i32) -> (i32, i32) {
    %c0_i32 = arith.constant 0 : i32
    %c0_i32_0 = arith.constant 0 : i32
    %c0_i32_1 = arith.constant 0 : i32
    return %c0_i32, %c0_i32_0 : i32, i32
  }
  func.func @transform_6(%arg0: i32) -> (i32, i32) {
    %c0_i32 = arith.constant 0 : i32
    %c0_i32_0 = arith.constant 0 : i32
    return %arg0, %c0_i32 : i32, i32
  }
}

</mosaic_0001>

<llo_original>
// kernel: fcmnist_forward.1
$region0: #{fcmnist_forward.1}
  #allocation0 [shape = 'u32[]', space=smem, size = 0x4, offset = 0x4, fixed_abs, tag = 'smem constant byte address 0x4 - core index']
  #allocation1 [shape = 'u32[144,128]{1,0:T(1,128)}', space=vmem, size = 0x12000, scoped, tag = 'internal scratch']
  %s0 = inlined_call_operand.vmem [shape: f32[4], index: 0, kind: input, shape index: {}]
  %s1 = inlined_call_operand.vmem [shape: f32[8,256], index: 1, kind: input, shape index: {}]
  %s2 = inlined_call_operand.vmem [shape: bf16[256,64], index: 2, kind: input, shape index: {}]
  %s3 = inlined_call_operand.vmem [shape: bf16[64,64], index: 3, kind: input, shape index: {}]
  %s4 = inlined_call_operand.vmem [shape: bf16[64,64], index: 4, kind: input, shape index: {}]
  %s5 = inlined_call_operand.vmem [shape: bf16[64,128], index: 5, kind: input, shape index: {}]
  %s6 = inlined_call_operand.vmem [shape: f32[8,128], index: 6, kind: output, shape index: {}]
  %s7 = sld [smem:[#allocation0]]
  $region38: #{fcmnist_forward.1} parent=0
    _
  %s9 = ssub.s32 1, %s7
  %s10 = scalar_select 0, %s9, %s7
  $region1: #{fcmnist_forward.1} parent=0
    #allocation2 [shape = 'u8[512]{0}', space=smem, size = 0x200, scoped, tag = 'input window, operand 0, single buffered']
    #allocation3 [shape = 's32[1]{0}', space=sflag, size = 0x4, scoped, tag = 'scoped memory for fcmnist_forward.1']
    %11 = vsyncpa [#allocation3], 0
    // Predicated region
    $region2: #{fcmnist_forward.1} parent=1 // pred_check
      _
    $region3: #{fcmnist_forward.1} parent=1 // pred_check_branch
      %13 = sbr.rel (0) target = $region5
    $region4: #{fcmnist_forward.1} parent=1 // pred_region
      %s15 = ssub.s32 16, 16
      %16 = vsyncadd [#allocation3], %s15
      %s18 = sshll.u32 %s0, 4
      %s19 = int_to_ptr.vmem [resolvable:$true] %s18
      %21 = dma.vmem_to_smem %s19, 16, [#allocation2], [#allocation3]
    $region5: #{fcmnist_forward.1} parent=1 // pred_fallthru
      _
    // Predicated region
    $region6: #{fcmnist_forward.1} parent=1 // pred_check
      _
    $region7: #{fcmnist_forward.1} parent=1 // pred_check_branch
      %23 = sbr.rel (0) target = $region9
    $region8: #{fcmnist_forward.1} parent=1 // pred_region
      _
    $region9: #{fcmnist_forward.1} parent=1 // pred_fallthru
      _
    // Predicated region
    $region10: #{fcmnist_forward.1} parent=1 // pred_check
      _
    $region11: #{fcmnist_forward.1} parent=1 // pred_check_branch
      %25 = sbr.rel (0) target = $region13
    $region12: #{fcmnist_forward.1} parent=1 // pred_region
      _
    $region13: #{fcmnist_forward.1} parent=1 // pred_fallthru
      _
    // Predicated region
    $region14: #{fcmnist_forward.1} parent=1 // pred_check
      _
    $region15: #{fcmnist_forward.1} parent=1 // pred_check_branch
      %27 = sbr.rel (0) target = $region17
    $region16: #{fcmnist_forward.1} parent=1 // pred_region
      _
    $region17: #{fcmnist_forward.1} parent=1 // pred_fallthru
      _
    // Predicated region
    $region18: #{fcmnist_forward.1} parent=1 // pred_check
      _
    $region19: #{fcmnist_forward.1} parent=1 // pred_check_branch
      %29 = sbr.rel (0) target = $region21
    $region20: #{fcmnist_forward.1} parent=1 // pred_region
      _
    $region21: #{fcmnist_forward.1} parent=1 // pred_fallthru
      _
    // Predicated region
    $region22: #{fcmnist_forward.1} parent=1 // pred_check
      _
    $region23: #{fcmnist_forward.1} parent=1 // pred_check_branch
      %31 = sbr.rel (0) target = $region25
    $region24: #{fcmnist_forward.1} parent=1 // pred_region
      _
    $region25: #{fcmnist_forward.1} parent=1 // pred_fallthru
      _
    // Predicated region
    $region26: #{fcmnist_forward.1} parent=1 // pred_check
      _
    $region27: #{fcmnist_forward.1} parent=1 // pred_check_branch
      %33 = sbr.rel (0) target = $region29
    $region28: #{fcmnist_forward.1} parent=1 // pred_region
      %34 = dma.done [#allocation3], 16
    $region29: #{fcmnist_forward.1} parent=1 // pred_fallthru
      _
    %35 = sfence
    %v37 = vld [vmem:[%s1] sm:$0xff]
    %v38 = vld [vmem:[%s1 + $0x8] sm:$0xff]
    %s39 = sld [smem:[#allocation2]]
    %v40 = vld [vmem:[%s2] sm:$0xf]
    %v41 = vld [vmem:[%s2 + $0x4] sm:$0xf]
    %v42 = vld [vmem:[%s2 + $0x8] sm:$0xf]
    %v43 = vld [vmem:[%s2 + $0xc] sm:$0xf]
    %v44 = vld [vmem:[%s2 + $0x10] sm:$0xf]
    %v45 = vld [vmem:[%s2 + $0x14] sm:$0xf]
    %v46 = vld [vmem:[%s2 + $0x18] sm:$0xf]
    %v47 = vld [vmem:[%s2 + $0x1c] sm:$0xf]
    %v48 = vld [vmem:[%s2 + $0x20] sm:$0xf]
    %v49 = vld [vmem:[%s2 + $0x24] sm:$0xf]
    %v50 = vld [vmem:[%s2 + $0x28] sm:$0xf]
    %v51 = vld [vmem:[%s2 + $0x2c] sm:$0xf]
    %v52 = vld [vmem:[%s2 + $0x30] sm:$0xf]
    %v53 = vld [vmem:[%s2 + $0x34] sm:$0xf]
    %v54 = vld [vmem:[%s2 + $0x38] sm:$0xf]
    %v55 = vld [vmem:[%s2 + $0x3c] sm:$0xf]
    %v56 = vld [vmem:[%s2 + $0x40] sm:$0xf]
    %v57 = vld [vmem:[%s2 + $0x44] sm:$0xf]
    %v58 = vld [vmem:[%s2 + $0x48] sm:$0xf]
    %v59 = vld [vmem:[%s2 + $0x4c] sm:$0xf]
    %v60 = vld [vmem:[%s2 + $0x50] sm:$0xf]
    %v61 = vld [vmem:[%s2 + $0x54] sm:$0xf]
    %v62 = vld [vmem:[%s2 + $0x58] sm:$0xf]
    %v63 = vld [vmem:[%s2 + $0x5c] sm:$0xf]
    %v64 = vld [vmem:[%s2 + $0x60] sm:$0xf]
    %v65 = vld [vmem:[%s2 + $0x64] sm:$0xf]
    %v66 = vld [vmem:[%s2 + $0x68] sm:$0xf]
    %v67 = vld [vmem:[%s2 + $0x6c] sm:$0xf]
    %v68 = vld [vmem:[%s2 + $0x70] sm:$0xf]
    %v69 = vld [vmem:[%s2 + $0x74] sm:$0xf]
    %v70 = vld [vmem:[%s2 + $0x78] sm:$0xf]
    %v71 = vld [vmem:[%s2 + $0x7c] sm:$0xf]
    %v72 = vmul.f32 %v37, %v37
    %v73 = vmul.f32 %v38, %v38
    %v74 = vadd.f32 %v72, %v73
    %75 = vadd.xlane.f32.xlu0 %v74
    %v76 = vpop.xlane.xlu0 %75
    %v77 = vmul.f32 %v76, 0.00390625
    %v78 = vrsqrt.pop %v77
    %v79 = vmul.f32 %v37, %v78
    %v80 = vmul.f32 %v38, %v78
    %v81 = vand.u32 2147483647, %v79
    %v82 = vand.u32 2147483647, %v80
    %v83 = vmax.f32 %v81, %v82
    %84 = vmax.xlane.f32.xlu0 %v83
    %v85 = vpop.xlane.xlu0 %84
    %v86 = vmax.f32 %v85, 1e-05
    %v87 = vrcp.pop %v86
    %v88 = vmul.f32 127.0, %v87
    %v89 = vmul.f32 %v79, %v88
    %v90 = vmul.f32 %v80, %v88
    %v91 = vround.ne.pseudo %v89
    %v92 = vround.ne.pseudo %v90
    %v93 = vmax.f32 %v91, -128.0
    %v94 = vmax.f32 %v92, -128.0
    %v95 = vmin.f32 %v93, 127.0
    %v96 = vmin.f32 %v94, 127.0
    %v97 = vpack.c.bf16 %v95, %v95
    %v98 = vpack.c.bf16 %v96, %v96
    %v131 = vunpack.c.l.b16 %v40
    %v132 = vunpack.c.l.b16 %v41
    %v133 = vunpack.c.l.b16 %v42
    %v134 = vunpack.c.l.b16 %v43
    %v135 = vunpack.c.l.b16 %v44
    %v136 = vunpack.c.l.b16 %v45
    %v137 = vunpack.c.l.b16 %v46
    %v138 = vunpack.c.l.b16 %v47
    %v139 = vunpack.c.l.b16 %v48
    %v140 = vunpack.c.l.b16 %v49
    %v141 = vunpack.c.l.b16 %v50
    %v142 = vunpack.c.l.b16 %v51
    %v143 = vunpack.c.l.b16 %v52
    %v144 = vunpack.c.l.b16 %v53
    %v145 = vunpack.c.l.b16 %v54
    %v146 = vunpack.c.l.b16 %v55
    %v147 = vunpack.c.l.b16 %v56
    %v148 = vunpack.c.l.b16 %v57
    %v149 = vunpack.c.l.b16 %v58
    %v150 = vunpack.c.l.b16 %v59
    %v151 = vunpack.c.l.b16 %v60
    %v152 = vunpack.c.l.b16 %v61
    %v153 = vunpack.c.l.b16 %v62
    %v154 = vunpack.c.l.b16 %v63
    %v155 = vunpack.c.l.b16 %v64
    %v156 = vunpack.c.l.b16 %v65
    %v157 = vunpack.c.l.b16 %v66
    %v158 = vunpack.c.l.b16 %v67
    %v159 = vunpack.c.l.b16 %v68
    %v160 = vunpack.c.l.b16 %v69
    %v161 = vunpack.c.l.b16 %v70
    %v162 = vunpack.c.l.b16 %v71
    %v163 = vpack.c.b16 %v132, %v131
    %v164 = vpack.c.b16 %v134, %v133
    %v165 = vpack.c.b16 %v136, %v135
    %v166 = vpack.c.b16 %v138, %v137
    %v167 = vpack.c.b16 %v140, %v139
    %v168 = vpack.c.b16 %v142, %v141
    %v169 = vpack.c.b16 %v144, %v143
    %v170 = vpack.c.b16 %v146, %v145
    %v171 = vpack.c.b16 %v148, %v147
    %v172 = vpack.c.b16 %v150, %v149
    %v173 = vpack.c.b16 %v152, %v151
    %v174 = vpack.c.b16 %v154, %v153
    %v175 = vpack.c.b16 %v156, %v155
    %v176 = vpack.c.b16 %v158, %v157
    %v177 = vpack.c.b16 %v160, %v159
    %v178 = vpack.c.b16 %v162, %v161
    %195 = vmatprep.subr.bf16.mxu0 0
    %196 = vmatpush1.bf16.msra.mxu0 %v163
    %197 = vmatprep.subr.bf16.mxu0 0
    %198 = vmatpush1.bf16.msra.mxu0 %v164
    %199 = vmatprep.subr.bf16.mxu0 0
    %200 = vmatpush1.bf16.msra.mxu0 %v165
    %201 = vmatprep.subr.bf16.mxu0 0
    %202 = vmatpush1.bf16.msra.mxu0 %v166
    %203 = vmatprep.subr.bf16.mxu0 0
    %204 = vmatpush1.bf16.msra.mxu0 %v167
    %205 = vmatprep.subr.bf16.mxu0 0
    %206 = vmatpush1.bf16.msra.mxu0 %v168
    %207 = vmatprep.subr.bf16.mxu0 0
    %208 = vmatpush1.bf16.msra.mxu0 %v169
    %209 = vmatprep.subr.bf16.mxu0 0
    %210 = vmatpush1.bf16.msra.mxu0 %v170
    %211 = vmatprep.subr.bf16.mxu0 0
    %212 = vmatpush1.bf16.msra.mxu0 %v171
    %213 = vmatprep.subr.bf16.mxu0 0
    %214 = vmatpush1.bf16.msra.mxu0 %v172
    %215 = vmatprep.subr.bf16.mxu0 0
    %216 = vmatpush1.bf16.msra.mxu0 %v173
    %217 = vmatprep.subr.bf16.mxu0 0
    %218 = vmatpush1.bf16.msra.mxu0 %v174
    %219 = vmatprep.subr.bf16.mxu0 0
    %220 = vmatpush1.bf16.msra.mxu0 %v175
    %221 = vmatprep.subr.bf16.mxu0 0
    %222 = vmatpush1.bf16.msra.mxu0 %v176
    %223 = vmatprep.subr.bf16.mxu0 0
    %224 = vmatpush1.bf16.msra.mxu0 %v177
    %225 = vmatprep.subr.bf16.mxu0 0
    %226 = vmatpush1.bf16.msra.mxu0 %v178
    %227 = vmatprep.mubr.bf16.mxu0 %v98
    %228 = vmatmul.mubr.bf16.gmra.mrb[0].mxu0 %v97
    %v229 = vpop.f32.mrb[0].mxu0
    %v230 = vadd.f32 0.0, %v229
    %v231 = vpop.f32.mrb[0].mxu0
    %v232 = vpop.f32.mrb[0].mxu0
    %v233 = vpop.f32.mrb[0].mxu0
    %234 = vdwg.mxu0
    %v235 = vstv %s39
    %v236 = vmul.f32 %v235, %v86
    %v237 = vmul.f32 %v236, 0.007874016
    %v238 = vmul.f32 %v230, %v237
    %v239 = vmax.f32 %v238, 0.0
    %s240 = sld [smem:[#allocation2 + $0x1]]
    %v241 = vld [vmem:[%s3] sm:$0xf]
    %v242 = vld [vmem:[%s3 + $0x4] sm:$0xf]
    %v243 = vld [vmem:[%s3 + $0x8] sm:$0xf]
    %v244 = vld [vmem:[%s3 + $0xc] sm:$0xf]
    %v245 = vld [vmem:[%s3 + $0x10] sm:$0xf]
    %v246 = vld [vmem:[%s3 + $0x14] sm:$0xf]
    %v247 = vld [vmem:[%s3 + $0x18] sm:$0xf]
    %v248 = vld [vmem:[%s3 + $0x1c] sm:$0xf]
    %v249 = vmul.f32 %v239, %v239
    %vm250 = vcmask 523264
    %v251 = vsel %vm250, %v249, 0.0
    %252 = vadd.xlane.f32.xlu0 %v251
    %v253 = vpop.xlane.xlu0 %252
    %v254 = vmul.f32 %v253, 0.015625
    %v255 = vrsqrt.pop %v254
    %v256 = vmul.f32 %v239, %v255
    %v257 = vand.u32 2147483647, %v256
    %v258 = vsel %vm250, %v257, -inf
    %259 = vmax.xlane.f32.xlu0 %v258
    %v260 = vpop.xlane.xlu0 %259
    %v261 = vmax.f32 %v260, 1e-05
    %v262 = vrcp.pop %v261
    %v263 = vmul.f32 127.0, %v262
    %v264 = vmul.f32 %v256, %v263
    %v265 = vround.ne.pseudo %v264
    %v266 = vmax.f32 %v265, -128.0
    %v267 = vmin.f32 %v266, 127.0
    %v268 = vpack.c.bf16 %v267, %v267
    %v277 = vunpack.c.l.b16 %v241
    %v278 = vunpack.c.l.b16 %v242
    %v279 = vunpack.c.l.b16 %v243
    %v280 = vunpack.c.l.b16 %v244
    %v281 = vunpack.c.l.b16 %v245
    %v282 = vunpack.c.l.b16 %v246
    %v283 = vunpack.c.l.b16 %v247
    %v284 = vunpack.c.l.b16 %v248
    %v285 = vpack.c.b16 %v278, %v277
    %v286 = vpack.c.b16 %v280, %v279
    %v287 = vpack.c.b16 %v282, %v281
    %v288 = vpack.c.b16 %v284, %v283
    %v294 = vsel %vm250, %v268, 0
    %296 = vmatprep.subr.bf16.mxu0 0
    %297 = vmatpush1.bf16.msra.mxu0 %v285
    %298 = vmatprep.subr.bf16.mxu0 0
    %299 = vmatpush1.bf16.msra.mxu0 %v286
    %300 = vmatprep.subr.bf16.mxu0 0
    %301 = vmatpush1.bf16.msra.mxu0 %v287
    %302 = vmatprep.subr.bf16.mxu0 0
    %303 = vmatpush1.bf16.msra.mxu0 %v288
    %304 = vmatprep.subr.bf16.mxu0 0
    %305 = vmatpush1.bf16.msra.mxu0 0
    %306 = vmatprep.subr.bf16.mxu0 0
    %307 = vmatpush1.bf16.msra.mxu0 0
    %308 = vmatprep.subr.bf16.mxu0 0
    %309 = vmatpush1.bf16.msra.mxu0 0
    %310 = vmatprep.subr.bf16.mxu0 0
    %311 = vmatpush1.bf16.msra.mxu0 0
    %312 = vmatprep.subr.bf16.mxu0 0
    %313 = vmatpush1.bf16.msra.mxu0 0
    %314 = vmatprep.subr.bf16.mxu0 0
    %315 = vmatpush1.bf16.msra.mxu0 0
    %316 = vmatprep.subr.bf16.mxu0 0
    %317 = vmatpush1.bf16.msra.mxu0 0
    %318 = vmatprep.subr.bf16.mxu0 0
    %319 = vmatpush1.bf16.msra.mxu0 0
    %320 = vmatprep.subr.bf16.mxu0 0
    %321 = vmatpush1.bf16.msra.mxu0 0
    %322 = vmatprep.subr.bf16.mxu0 0
    %323 = vmatpush1.bf16.msra.mxu0 0
    %324 = vmatprep.subr.bf16.mxu0 0
    %325 = vmatpush1.bf16.msra.mxu0 0
    %326 = vmatprep.subr.bf16.mxu0 0
    %327 = vmatpush1.bf16.msra.mxu0 0
    %328 = vmatprep.mubr.bf16.mxu0 0
    %329 = vmatmul.mubr.bf16.gmra.mrb[0].mxu0 %v294
    %v330 = vpop.f32.mrb[0].mxu0
    %v331 = vadd.f32 0.0, %v330
    %v332 = vpop.f32.mrb[0].mxu0
    %v333 = vpop.f32.mrb[0].mxu0
    %v334 = vpop.f32.mrb[0].mxu0
    %335 = vdwg.mxu0
    %v336 = vstv %s240
    %v337 = vmul.f32 %v336, %v261
    %v338 = vmul.f32 %v337, 0.007874016
    %v339 = vmul.f32 %v331, %v338
    %v340 = vmax.f32 %v339, 0.0
    %s341 = sld [smem:[#allocation2 + $0x2]]
    %v342 = vld [vmem:[%s4] sm:$0xf]
    %v343 = vld [vmem:[%s4 + $0x4] sm:$0xf]
    %v344 = vld [vmem:[%s4 + $0x8] sm:$0xf]
    %v345 = vld [vmem:[%s4 + $0xc] sm:$0xf]
    %v346 = vld [vmem:[%s4 + $0x10] sm:$0xf]
    %v347 = vld [vmem:[%s4 + $0x14] sm:$0xf]
    %v348 = vld [vmem:[%s4 + $0x18] sm:$0xf]
    %v349 = vld [vmem:[%s4 + $0x1c] sm:$0xf]
    %v350 = vmul.f32 %v340, %v340
    %v351 = vsel %vm250, %v350, 0.0
    %352 = vadd.xlane.f32.xlu0 %v351
    %v353 = vpop.xlane.xlu0 %352
    %v354 = vmul.f32 %v353, 0.015625
    %v355 = vrsqrt.pop %v354
    %v356 = vmul.f32 %v340, %v355
    %v357 = vand.u32 2147483647, %v356
    %v358 = vsel %vm250, %v357, -inf
    %359 = vmax.xlane.f32.xlu0 %v358
    %v360 = vpop.xlane.xlu0 %359
    %v361 = vmax.f32 %v360, 1e-05
    %v362 = vrcp.pop %v361
    %v363 = vmul.f32 127.0, %v362
    %v364 = vmul.f32 %v356, %v363
    %v365 = vround.ne.pseudo %v364
    %v366 = vmax.f32 %v365, -128.0
    %v367 = vmin.f32 %v366, 127.0
    %v368 = vpack.c.bf16 %v367, %v367
    %v377 = vunpack.c.l.b16 %v342
    %v378 = vunpack.c.l.b16 %v343
    %v379 = vunpack.c.l.b16 %v344
    %v380 = vunpack.c.l.b16 %v345
    %v381 = vunpack.c.l.b16 %v346
    %v382 = vunpack.c.l.b16 %v347
    %v383 = vunpack.c.l.b16 %v348
    %v384 = vunpack.c.l.b16 %v349
    %v385 = vpack.c.b16 %v378, %v377
    %v386 = vpack.c.b16 %v380, %v379
    %v387 = vpack.c.b16 %v382, %v381
    %v388 = vpack.c.b16 %v384, %v383
    %v394 = vsel %vm250, %v368, 0
    %396 = vmatprep.subr.bf16.mxu0 0
    %397 = vmatpush1.bf16.msra.mxu0 %v385
    %398 = vmatprep.subr.bf16.mxu0 0
    %399 = vmatpush1.bf16.msra.mxu0 %v386
    %400 = vmatprep.subr.bf16.mxu0 0
    %401 = vmatpush1.bf16.msra.mxu0 %v387
    %402 = vmatprep.subr.bf16.mxu0 0
    %403 = vmatpush1.bf16.msra.mxu0 %v388
    %404 = vmatprep.subr.bf16.mxu0 0
    %405 = vmatpush1.bf16.msra.mxu0 0
    %406 = vmatprep.subr.bf16.mxu0 0
    %407 = vmatpush1.bf16.msra.mxu0 0
    %408 = vmatprep.subr.bf16.mxu0 0
    %409 = vmatpush1.bf16.msra.mxu0 0
    %410 = vmatprep.subr.bf16.mxu0 0
    %411 = vmatpush1.bf16.msra.mxu0 0
    %412 = vmatprep.subr.bf16.mxu0 0
    %413 = vmatpush1.bf16.msra.mxu0 0
    %414 = vmatprep.subr.bf16.mxu0 0
    %415 = vmatpush1.bf16.msra.mxu0 0
    %416 = vmatprep.subr.bf16.mxu0 0
    %417 = vmatpush1.bf16.msra.mxu0 0
    %418 = vmatprep.subr.bf16.mxu0 0
    %419 = vmatpush1.bf16.msra.mxu0 0
    %420 = vmatprep.subr.bf16.mxu0 0
    %421 = vmatpush1.bf16.msra.mxu0 0
    %422 = vmatprep.subr.bf16.mxu0 0
    %423 = vmatpush1.bf16.msra.mxu0 0
    %424 = vmatprep.subr.bf16.mxu0 0
    %425 = vmatpush1.bf16.msra.mxu0 0
    %426 = vmatprep.subr.bf16.mxu0 0
    %427 = vmatpush1.bf16.msra.mxu0 0
    %428 = vmatprep.mubr.bf16.mxu0 0
    %429 = vmatmul.mubr.bf16.gmra.mrb[0].mxu0 %v394
    %v430 = vpop.f32.mrb[0].mxu0
    %v431 = vadd.f32 0.0, %v430
    %v432 = vpop.f32.mrb[0].mxu0
    %v433 = vpop.f32.mrb[0].mxu0
    %v434 = vpop.f32.mrb[0].mxu0
    %435 = vdwg.mxu0
    %v436 = vstv %s341
    %v437 = vmul.f32 %v436, %v361
    %v438 = vmul.f32 %v437, 0.007874016
    %v439 = vmul.f32 %v431, %v438
    %v440 = vmax.f32 %v439, 0.0
    %s441 = sld [smem:[#allocation2 + $0x3]]
    %v442 = vld [vmem:[%s5] sm:$0xf]
    %v443 = vld [vmem:[%s5 + $0x4] sm:$0xf]
    %v444 = vld [vmem:[%s5 + $0x8] sm:$0xf]
    %v445 = vld [vmem:[%s5 + $0xc] sm:$0xf]
    %v446 = vld [vmem:[%s5 + $0x10] sm:$0xf]
    %v447 = vld [vmem:[%s5 + $0x14] sm:$0xf]
    %v448 = vld [vmem:[%s5 + $0x18] sm:$0xf]
    %v449 = vld [vmem:[%s5 + $0x1c] sm:$0xf]
    %v450 = vmul.f32 %v440, %v440
    %v451 = vsel %vm250, %v450, 0.0
    %452 = vadd.xlane.f32.xlu0 %v451
    %v453 = vpop.xlane.xlu0 %452
    %v454 = vmul.f32 %v453, 0.015625
    %v455 = vrsqrt.pop %v454
    %v456 = vmul.f32 %v440, %v455
    %v457 = vand.u32 2147483647, %v456
    %v458 = vsel %vm250, %v457, -inf
    %459 = vmax.xlane.f32.xlu0 %v458
    %v460 = vpop.xlane.xlu0 %459
    %v461 = vmax.f32 %v460, 1e-05
    %v462 = vrcp.pop %v461
    %v463 = vmul.f32 127.0, %v462
    %v464 = vmul.f32 %v456, %v463
    %v465 = vround.ne.pseudo %v464
    %v466 = vmax.f32 %v465, -128.0
    %v467 = vmin.f32 %v466, 127.0
    %v468 = vpack.c.bf16 %v467, %v467
    %v477 = vunpack.c.l.b16 %v442
    %v478 = vunpack.c.l.b16 %v443
    %v479 = vunpack.c.l.b16 %v444
    %v480 = vunpack.c.l.b16 %v445
    %v481 = vunpack.c.l.b16 %v446
    %v482 = vunpack.c.l.b16 %v447
    %v483 = vunpack.c.l.b16 %v448
    %v484 = vunpack.c.l.b16 %v449
    %v485 = vpack.c.b16 %v478, %v477
    %v486 = vpack.c.b16 %v480, %v479
    %v487 = vpack.c.b16 %v482, %v481
    %v488 = vpack.c.b16 %v484, %v483
    %v494 = vsel %vm250, %v468, 0
    %496 = vmatprep.subr.bf16.mxu0 0
    %497 = vmatpush1.bf16.msra.mxu0 %v485
    %498 = vmatprep.subr.bf16.mxu0 0
    %499 = vmatpush1.bf16.msra.mxu0 %v486
    %500 = vmatprep.subr.bf16.mxu0 0
    %501 = vmatpush1.bf16.msra.mxu0 %v487
    %502 = vmatprep.subr.bf16.mxu0 0
    %503 = vmatpush1.bf16.msra.mxu0 %v488
    %504 = vmatprep.subr.bf16.mxu0 0
    %505 = vmatpush1.bf16.msra.mxu0 0
    %506 = vmatprep.subr.bf16.mxu0 0
    %507 = vmatpush1.bf16.msra.mxu0 0
    %508 = vmatprep.subr.bf16.mxu0 0
    %509 = vmatpush1.bf16.msra.mxu0 0
    %510 = vmatprep.subr.bf16.mxu0 0
    %511 = vmatpush1.bf16.msra.mxu0 0
    %512 = vmatprep.subr.bf16.mxu0 0
    %513 = vmatpush1.bf16.msra.mxu0 0
    %514 = vmatprep.subr.bf16.mxu0 0
    %515 = vmatpush1.bf16.msra.mxu0 0
    %516 = vmatprep.subr.bf16.mxu0 0
    %517 = vmatpush1.bf16.msra.mxu0 0
    %518 = vmatprep.subr.bf16.mxu0 0
    %519 = vmatpush1.bf16.msra.mxu0 0
    %520 = vmatprep.subr.bf16.mxu0 0
    %521 = vmatpush1.bf16.msra.mxu0 0
    %522 = vmatprep.subr.bf16.mxu0 0
    %523 = vmatpush1.bf16.msra.mxu0 0
    %524 = vmatprep.subr.bf16.mxu0 0
    %525 = vmatpush1.bf16.msra.mxu0 0
    %526 = vmatprep.subr.bf16.mxu0 0
    %527 = vmatpush1.bf16.msra.mxu0 0
    %528 = vmatprep.mubr.bf16.mxu0 0
    %529 = vmatmul.mubr.bf16.gmra.mrb[0].mxu0 %v494
    %v530 = vpop.f32.mrb[0].mxu0
    %v531 = vadd.f32 0.0, %v530
    %v532 = vpop.f32.mrb[0].mxu0
    %v533 = vpop.f32.mrb[0].mxu0
    %v534 = vpop.f32.mrb[0].mxu0
    %535 = vdwg.mxu0
    %v536 = vstv %s441
    %v537 = vmul.f32 %v536, %v461
    %v538 = vmul.f32 %v537, 0.007874016
    %v539 = vmul.f32 %v531, %v538
    %540 = vst [vmem:[%s6] sm:$0xff] %v539
    // Predicated region
    $region30: #{fcmnist_forward.1} parent=1 // pred_check
      _
    $region31: #{fcmnist_forward.1} parent=1 // pred_check_branch
      %542 = sbr.rel (0) target = $region33
    $region32: #{fcmnist_forward.1} parent=1 // pred_region
      _
    $region33: #{fcmnist_forward.1} parent=1 // pred_fallthru
      _
    // Predicated region
    $region34: #{fcmnist_forward.1} parent=1 // pred_check
      _
    $region35: #{fcmnist_forward.1} parent=1 // pred_check_branch
      %544 = sbr.rel (0) target = $region37
    $region36: #{fcmnist_forward.1} parent=1 // pred_region
      _
    $region37: #{fcmnist_forward.1} parent=1 // pred_fallthru
      _
    %545 = vsyncpa [#allocation3], 1

</llo_original>
